<compile_context>
chip_gen: v7x
topology: tpu7x:2x2x1
jax: 0.10.0
libtpu: 0.0.40
codegen_flags: <defaults>
</compile_context>

<pallas_src>
import jax
import jax.numpy as jnp
from jax import lax
from jax.experimental import pallas as pl
from jax.experimental.pallas import tpu as pltpu


def memory_module_kernel(tok_ref, mem_ref, gb_ref, out_ref, score_ref):
    # tok_ref : (B*N, D)  tokens, row r = (b, n) with b = r // N
    # mem_ref : (M, D)    memory bank
    # gb_ref  : (B*N, 2)  column 0 = gamma per row, column 1 = beta per row
    # out_ref : (B*N, D)  BatchNorm'd updated tokens
    # score_ref: (B, M)   attention scores
    BN, D = tok_ref.shape
    M = mem_ref.shape[0]
    B = score_ref.shape[0]
    N = BN // B

    tok = tok_ref[...].astype(jnp.float32)        # (BN, D)
    mem = mem_ref[...].astype(jnp.float32)        # (M, D)

    # Adaptive avg / max pool over token_dim (lane axis) per (b, n) row.
    ap = jnp.mean(tok, axis=-1, keepdims=True)    # (BN, 1)
    mp = jnp.max(tok, axis=-1, keepdims=True)     # (BN, 1)
    gate = ap + mp + 1e-6
    weighted = tok * gate                         # (BN, D)

    # re_semantic_tokens: sum the N token rows of each batch element -> (B, D).
    re_rows = [jnp.sum(weighted[b * N:(b + 1) * N, :], axis=0, keepdims=True)
               for b in range(B)]
    re_tok = jnp.concatenate(re_rows, axis=0)     # (B, D)

    # attention_scores = re_tok @ memory.T on the VPU (broadcast + lane reduce);
    # the MXU would be grossly under-filled at this size.
    scores = jnp.sum(re_tok[:, None, :] * mem[None, :, :], axis=-1)   # (B, M)
    scores = jnp.clip(scores, -1.0e6, 1.0e6)
    score_ref[...] = scores.astype(score_ref.dtype)

    # In-kernel argmax (first occurrence), used only for the memory-row gather.
    # NaN scores fall through to index M, clamped to M-1 (torch would return the
    # NaN position; divergence only on pathological inputs).
    col = lax.broadcasted_iota(jnp.int32, (B, M), 1)
    maxv = jnp.max(scores, axis=1, keepdims=True)                     # (B, 1)
    idx = jnp.min(jnp.where(scores == maxv, col, M), axis=1, keepdims=True)
    idx = jnp.minimum(idx, M - 1)                                     # (B, 1)

    # memory[idx] gather as one-hot multiply + reduce (tiny; keeps MXU cold and
    # avoids staging the index through SMEM for a dynamic-row load).
    onehot = (col == idx).astype(jnp.float32)                         # (B, M)
    sel = jnp.sum(onehot[:, :, None] * mem[None, :, :], axis=1)       # (B, D)

    # Broadcast each batch's selected memory row over its N token rows.
    sel_rows = jnp.concatenate(
        [jnp.broadcast_to(sel[b:b + 1, :], (N, D)) for b in range(B)], axis=0)

    # 0.4 * tokens * memory[cat] + 0.6 * tokens ; NaN/Inf -> 0 (exactly as torch).
    upd = 0.4 * tok * sel_rows + 0.6 * tok                            # (BN, D)
    upd = jnp.where(jnp.isfinite(upd), upd, 0.0)

    # BatchNorm1d(N), training mode: biased batch stats per channel over (B, D),
    # eps = 1e-5.  Channel of row r is r % N, so per-channel sums are sums of
    # the B sublane blocks of the (BN, 1) row-sum column.
    # TODO(synk): running_mean / running_var buffers are not updated (forward
    # math only).
    inv_bd = 1.0 / float(B * D)

    rsum = jnp.sum(upd, axis=-1, keepdims=True)                       # (BN, 1)
    ch_sum = rsum[0:N, :]
    for b in range(1, B):
        ch_sum = ch_sum + rsum[b * N:(b + 1) * N, :]                  # (N, 1)
    mean_rows = jnp.concatenate([ch_sum] * B, axis=0) * inv_bd        # (BN, 1)

    diff = upd - mean_rows
    vsum = jnp.sum(diff * diff, axis=-1, keepdims=True)               # (BN, 1)
    ch_var = vsum[0:N, :]
    for b in range(1, B):
        ch_var = ch_var + vsum[b * N:(b + 1) * N, :]
    var_rows = jnp.concatenate([ch_var] * B, axis=0) * inv_bd         # (BN, 1)

    # Affine from the pre-tiled (BN, 2) gamma/beta input; gamma folded into the
    # rsqrt scale.  Single full-width store of the whole result.
    gamma_rows = gb_ref[:, 0:1]                                       # (BN, 1)
    beta_rows = gb_ref[:, 1:2]                                        # (BN, 1)
    scale = lax.rsqrt(var_rows + 1e-5) * gamma_rows
    out_ref[...] = (diff * scale + beta_rows).astype(out_ref.dtype)


def memory_module_forward(tokens, memory, gamma, beta):
    B, N, D = tokens.shape
    M = memory.shape[0]

    # Sublane-dense carrier: row b*N + n holds tokens[b, n, :].
    tok2 = tokens.astype(jnp.float32).reshape(B * N, D)
    # Pre-tile gamma/beta per row (channel n = row % N): one tiny VMEM input,
    # no per-channel scalar broadcasts inside the kernel.
    gamma_rows = jnp.tile(gamma.astype(jnp.float32), (B,)).reshape(B * N, 1)
    beta_rows = jnp.tile(beta.astype(jnp.float32), (B,)).reshape(B * N, 1)
    gb = jnp.concatenate([gamma_rows, beta_rows], axis=1)             # (BN, 2)

    out_shapes = (
        jax.ShapeDtypeStruct((B * N, D), jnp.float32),   # updated tokens (flat)
        jax.ShapeDtypeStruct((B, M), jnp.float32),       # attention scores
    )
    upd_flat, scores = pl.pallas_call(
        memory_module_kernel,
        out_shape=out_shapes,
        in_specs=[
            pl.BlockSpec(memory_space=pltpu.MemorySpace.VMEM),   # tokens (BN, D)
            pl.BlockSpec(memory_space=pltpu.MemorySpace.VMEM),   # memory (M, D)
            pl.BlockSpec(memory_space=pltpu.MemorySpace.VMEM),   # gamma/beta (BN, 2)
        ],
        out_specs=(
            pl.BlockSpec(memory_space=pltpu.MemorySpace.VMEM),
            pl.BlockSpec(memory_space=pltpu.MemorySpace.VMEM),
        ),
    )(tok2, memory.astype(jnp.float32), gb)

    # Category indices computed in the wrapper from the returned scores
    # (int32 instead of torch's int64).
    category_indices = jnp.argmax(scores, axis=-1).astype(jnp.int32)
    return upd_flat.reshape(B, N, D), category_indices, scores


def memory_module_reference(tokens, memory, gamma, beta):
    """Pure-JAX reference of the PyTorch forward (for validation)."""
    ap = jnp.mean(tokens, axis=-1, keepdims=True)
    mp = jnp.max(tokens, axis=-1, keepdims=True)
    gate = ap + mp + 1e-6
    re = jnp.sum(tokens * gate, axis=1)
    scores = jnp.clip(re @ memory.T, -1.0e6, 1.0e6)
    cat = jnp.argmax(scores, axis=1).astype(jnp.int32)
    sel = memory[cat]
    upd = 0.4 * tokens * sel[:, None, :] + 0.6 * tokens
    upd = jnp.where(jnp.isfinite(upd), upd, 0.0)
    mean = jnp.mean(upd, axis=(0, 2), keepdims=True)
    var = jnp.mean((upd - mean) ** 2, axis=(0, 2), keepdims=True)
    norm = (upd - mean) * lax.rsqrt(var + 1e-5)
    out = norm * gamma[None, :, None] + beta[None, :, None]
    return out, cat, scores


if __name__ == "__main__":
    # Shapes implied by the module: BatchNorm1d(4) forces n_tokens == 4.
    B, N_TOKENS, TOKEN_DIM, MEMORY_SIZE = 2, 4, 32, 8

    key = jax.random.PRNGKey(0)
    k_tok, k_mem, k_g, k_b = jax.random.split(key, 4)

    semantic_tokens = jax.random.normal(
        k_tok, (B, N_TOKENS, TOKEN_DIM), dtype=jnp.float32)

    # nn.Parameter(zeros) + xavier_normal_: std = sqrt(2 / (fan_in + fan_out))
    xavier_std = (2.0 / (MEMORY_SIZE + TOKEN_DIM)) ** 0.5
    memory = xavier_std * jax.random.normal(
        k_mem, (MEMORY_SIZE, TOKEN_DIM), dtype=jnp.float32)

    # BatchNorm affine params (non-trivial values to exercise the affine path;
    # torch default init would be gamma=1, beta=0).
    bn_gamma = 1.0 + 0.1 * jax.random.normal(k_g, (N_TOKENS,), dtype=jnp.float32)
    bn_beta = 0.05 * jax.random.normal(k_b, (N_TOKENS,), dtype=jnp.float32)

    updated, category_indices, attention_scores = memory_module_forward(
        semantic_tokens, memory, bn_gamma, bn_beta)
    jax.block_until_ready((updated, category_indices, attention_scores))

    assert updated.shape == (B, N_TOKENS, TOKEN_DIM)
    assert category_indices.shape == (B,)
    assert attention_scores.shape == (B, MEMORY_SIZE)
    assert bool(jnp.all(jnp.isfinite(updated)))
    assert bool(jnp.all((category_indices >= 0) & (category_indices < MEMORY_SIZE)))

    ref_upd, ref_cat, ref_scores = memory_module_reference(
        semantic_tokens, memory, bn_gamma, bn_beta)
    assert bool(jnp.allclose(attention_scores, ref_scores, rtol=1e-3, atol=1e-3))
    assert bool(jnp.all(category_indices == ref_cat))
    assert bool(jnp.allclose(updated, ref_upd, rtol=1e-3, atol=1e-3))

    print("KERNEL_OK")
</pallas_src>

<mosaic_0001>
module attributes {stable_mosaic.version = 11 : i64} {
  func.func @memory_module_kernel(%arg0: memref<8x32xf32, #tpu.memory_space<vmem>>, %arg1: memref<8x32xf32, #tpu.memory_space<vmem>>, %arg2: memref<8x2xf32, #tpu.memory_space<vmem>>, %arg3: memref<8x32xf32, #tpu.memory_space<vmem>>, %arg4: memref<2x8xf32, #tpu.memory_space<vmem>>) attributes {dimension_semantics = [], scalar_prefetch = 0 : i64, scratch_operands = 0 : i64, tpu.core_type = #tpu.core_type<tc>} {
    %c0 = arith.constant 0 : index
    %c0_0 = arith.constant 0 : index
    %0 = vector.load %arg0[%c0, %c0_0] : memref<8x32xf32, #tpu.memory_space<vmem>>, vector<8x32xf32>
    %c0_1 = arith.constant 0 : index
    %c0_2 = arith.constant 0 : index
    %1 = vector.load %arg1[%c0_1, %c0_2] : memref<8x32xf32, #tpu.memory_space<vmem>>, vector<8x32xf32>
    %cst = arith.constant dense<0.000000e+00> : vector<8xf32>
    %2 = vector.multi_reduction <add>, %0, %cst [1] : vector<8x32xf32> to vector<8xf32>
    %3 = vector.shape_cast %2 : vector<8xf32> to vector<8x1xf32>
    %cst_3 = arith.constant 3.200000e+01 : f32
    %4 = vector.broadcast %cst_3 : f32 to vector<8x1xf32>
    %5 = arith.divf %3, %4 : vector<8x1xf32>
    %cst_4 = arith.constant dense<0xFF800000> : vector<8xf32>
    %6 = vector.multi_reduction <maximumf>, %0, %cst_4 [1] : vector<8x32xf32> to vector<8xf32>
    %7 = vector.shape_cast %6 : vector<8xf32> to vector<8x1xf32>
    %8 = arith.addf %5, %7 : vector<8x1xf32>
    %cst_5 = arith.constant 9.99999997E-7 : f32
    %9 = vector.broadcast %cst_5 : f32 to vector<8x1xf32>
    %10 = arith.addf %8, %9 : vector<8x1xf32>
    %11 = vector.broadcast %10 : vector<8x1xf32> to vector<8x32xf32>
    %12 = arith.mulf %0, %11 : vector<8x32xf32>
    %13 = vector.extract_strided_slice %12 {offsets = [0, 0], sizes = [4, 32], strides = [1, 1]} : vector<8x32xf32> to vector<4x32xf32>
    %cst_6 = arith.constant dense<0.000000e+00> : vector<32xf32>
    %14 = vector.multi_reduction <add>, %13, %cst_6 [0] : vector<4x32xf32> to vector<32xf32>
    %15 = vector.shape_cast %14 : vector<32xf32> to vector<1x32xf32>
    %16 = vector.extract_strided_slice %12 {offsets = [4, 0], sizes = [4, 32], strides = [1, 1]} : vector<8x32xf32> to vector<4x32xf32>
    %cst_7 = arith.constant dense<0.000000e+00> : vector<32xf32>
    %17 = vector.multi_reduction <add>, %16, %cst_7 [0] : vector<4x32xf32> to vector<32xf32>
    %18 = vector.shape_cast %17 : vector<32xf32> to vector<1x32xf32>
    %19 = tpu.concatenate %15, %18 in 0 : vector<1x32xf32>, vector<1x32xf32> -> vector<2x32xf32>
    %20 = vector.shape_cast %19 : vector<2x32xf32> to vector<2x1x32xf32>
    %21 = vector.shape_cast %1 : vector<8x32xf32> to vector<1x8x32xf32>
    %22 = vector.broadcast %20 : vector<2x1x32xf32> to vector<2x8x32xf32>
    %23 = vector.broadcast %21 : vector<1x8x32xf32> to vector<2x8x32xf32>
    %24 = arith.mulf %22, %23 : vector<2x8x32xf32>
    %cst_8 = arith.constant dense<0.000000e+00> : vector<2x8xf32>
    %25 = vector.multi_reduction <add>, %24, %cst_8 [2] : vector<2x8x32xf32> to vector<2x8xf32>
    %cst_9 = arith.constant -1.000000e+06 : f32
    %cst_10 = arith.constant 1.000000e+06 : f32
    %26 = vector.broadcast %cst_9 : f32 to vector<2x8xf32>
    %27 = arith.maximumf %26, %25 : vector<2x8xf32>
    %28 = vector.broadcast %cst_10 : f32 to vector<2x8xf32>
    %29 = arith.minimumf %28, %27 : vector<2x8xf32>
    %c0_11 = arith.constant 0 : index
    %c0_12 = arith.constant 0 : index
    %30 = vector.load %arg4[%c0_11, %c0_12] : memref<2x8xf32, #tpu.memory_space<vmem>>, vector<2x8xf32>
    tpu.vector_store %arg4[%c0_11, %c0_12], %29 {strides = array<i32>} : memref<2x8xf32, #tpu.memory_space<vmem>>, vector<2x8xf32>,
    %31 = tpu.iota {dimensions = array<i32: 1>} : vector<2x8xi32>
    %cst_13 = arith.constant dense<0xFF800000> : vector<2xf32>
    %32 = vector.multi_reduction <maximumf>, %29, %cst_13 [1] : vector<2x8xf32> to vector<2xf32>
    %33 = vector.shape_cast %32 : vector<2xf32> to vector<2x1xf32>
    %34 = vector.broadcast %33 : vector<2x1xf32> to vector<2x8xf32>
    %35 = arith.cmpf oeq, %29, %34 : vector<2x8xf32>
    %c8_i32 = arith.constant 8 : i32
    %36 = vector.broadcast %c8_i32 : i32 to vector<2x8xi32>
    %37 = arith.select %35, %31, %36 : vector<2x8xi1>, vector<2x8xi32>
    %cst_14 = arith.constant dense<2147483647> : vector<2xi32>
    %38 = vector.multi_reduction <minsi>, %37, %cst_14 [1] : vector<2x8xi32> to vector<2xi32>
    %39 = vector.shape_cast %38 : vector<2xi32> to vector<2x1xi32>
    %c7_i32 = arith.constant 7 : i32
    %40 = vector.broadcast %c7_i32 : i32 to vector<2x1xi32>
    %41 = arith.minsi %39, %40 : vector<2x1xi32>
    %42 = vector.broadcast %41 : vector<2x1xi32> to vector<2x8xi32>
    %43 = arith.cmpi eq, %31, %42 : vector<2x8xi32>
    %44 = arith.extui %43 : vector<2x8xi1> to vector<2x8xi32>
    %45 = arith.sitofp %44 : vector<2x8xi32> to vector<2x8xf32>
    %46 = vector.shape_cast %45 : vector<2x8xf32> to vector<2x8x1xf32>
    %47 = vector.shape_cast %1 : vector<8x32xf32> to vector<1x8x32xf32>
    %48 = vector.broadcast %46 : vector<2x8x1xf32> to vector<2x8x32xf32>
    %49 = vector.broadcast %47 : vector<1x8x32xf32> to vector<2x8x32xf32>
    %50 = arith.mulf %48, %49 : vector<2x8x32xf32>
    %cst_15 = arith.constant dense<0.000000e+00> : vector<2x32xf32>
    %51 = vector.multi_reduction <add>, %50, %cst_15 [1] : vector<2x8x32xf32> to vector<2x32xf32>
    %52 = vector.extract_strided_slice %51 {offsets = [0, 0], sizes = [1, 32], strides = [1, 1]} : vector<2x32xf32> to vector<1x32xf32>
    %53 = vector.shape_cast %52 : vector<1x32xf32> to vector<1x32xf32>
    %54 = vector.broadcast %53 : vector<1x32xf32> to vector<4x32xf32>
    %55 = vector.extract_strided_slice %51 {offsets = [1, 0], sizes = [1, 32], strides = [1, 1]} : vector<2x32xf32> to vector<1x32xf32>
    %56 = vector.shape_cast %55 : vector<1x32xf32> to vector<1x32xf32>
    %57 = vector.broadcast %56 : vector<1x32xf32> to vector<4x32xf32>
    %58 = tpu.concatenate %54, %57 in 0 : vector<4x32xf32>, vector<4x32xf32> -> vector<8x32xf32>
    %cst_16 = arith.constant 4.000000e-01 : f32
    %59 = vector.broadcast %cst_16 : f32 to vector<8x32xf32>
    %60 = arith.mulf %59, %0 : vector<8x32xf32>
    %61 = arith.mulf %60, %58 : vector<8x32xf32>
    %cst_17 = arith.constant 6.000000e-01 : f32
    %62 = vector.broadcast %cst_17 : f32 to vector<8x32xf32>
    %63 = arith.mulf %62, %0 : vector<8x32xf32>
    %64 = arith.addf %61, %63 : vector<8x32xf32>
    %65 = tpu.weird %64 : vector<8x32xf32> -> vector<8x32xi1>
    %cst_18 = arith.constant dense<true> : vector<8x32xi1>
    %66 = arith.xori %65, %cst_18 : vector<8x32xi1>
    %cst_19 = arith.constant 0.000000e+00 : f32
    %67 = vector.broadcast %cst_19 : f32 to vector<8x32xf32>
    %68 = arith.select %66, %64, %67 : vector<8x32xi1>, vector<8x32xf32>
    %cst_20 = arith.constant dense<0.000000e+00> : vector<8xf32>
    %69 = vector.multi_reduction <add>, %68, %cst_20 [1] : vector<8x32xf32> to vector<8xf32>
    %70 = vector.shape_cast %69 : vector<8xf32> to vector<8x1xf32>
    %71 = vector.extract_strided_slice %70 {offsets = [0, 0], sizes = [4, 1], strides = [1, 1]} : vector<8x1xf32> to vector<4x1xf32>
    %72 = vector.extract_strided_slice %70 {offsets = [4, 0], sizes = [4, 1], strides = [1, 1]} : vector<8x1xf32> to vector<4x1xf32>
    %73 = arith.addf %71, %72 : vector<4x1xf32>
    %74 = tpu.concatenate %73, %73 in 0 : vector<4x1xf32>, vector<4x1xf32> -> vector<8x1xf32>
    %cst_21 = arith.constant 1.562500e-02 : f32
    %75 = vector.broadcast %cst_21 : f32 to vector<8x1xf32>
    %76 = arith.mulf %74, %75 : vector<8x1xf32>
    %77 = vector.broadcast %76 : vector<8x1xf32> to vector<8x32xf32>
    %78 = arith.subf %68, %77 : vector<8x32xf32>
    %79 = arith.mulf %78, %78 : vector<8x32xf32>
    %cst_22 = arith.constant dense<0.000000e+00> : vector<8xf32>
    %80 = vector.multi_reduction <add>, %79, %cst_22 [1] : vector<8x32xf32> to vector<8xf32>
    %81 = vector.shape_cast %80 : vector<8xf32> to vector<8x1xf32>
    %82 = vector.extract_strided_slice %81 {offsets = [0, 0], sizes = [4, 1], strides = [1, 1]} : vector<8x1xf32> to vector<4x1xf32>
    %83 = vector.extract_strided_slice %81 {offsets = [4, 0], sizes = [4, 1], strides = [1, 1]} : vector<8x1xf32> to vector<4x1xf32>
    %84 = arith.addf %82, %83 : vector<4x1xf32>
    %85 = tpu.concatenate %84, %84 in 0 : vector<4x1xf32>, vector<4x1xf32> -> vector<8x1xf32>
    %cst_23 = arith.constant 1.562500e-02 : f32
    %86 = vector.broadcast %cst_23 : f32 to vector<8x1xf32>
    %87 = arith.mulf %85, %86 : vector<8x1xf32>
    %c0_24 = arith.constant 0 : index
    %c0_25 = arith.constant 0 : index
    %88 = vector.load %arg2[%c0_24, %c0_25] : memref<8x2xf32, #tpu.memory_space<vmem>>, vector<8x1xf32>
    %c0_26 = arith.constant 0 : index
    %c1 = arith.constant 1 : index
    %89 = vector.load %arg2[%c0_26, %c1] : memref<8x2xf32, #tpu.memory_space<vmem>>, vector<8x1xf32>
    %cst_27 = arith.constant 9.99999974E-6 : f32
    %90 = vector.broadcast %cst_27 : f32 to vector<8x1xf32>
    %91 = arith.addf %87, %90 : vector<8x1xf32>
    %92 = math.rsqrt %91 : vector<8x1xf32>
    %93 = arith.mulf %92, %88 : vector<8x1xf32>
    %94 = vector.broadcast %93 : vector<8x1xf32> to vector<8x32xf32>
    %95 = arith.mulf %78, %94 : vector<8x32xf32>
    %96 = vector.broadcast %89 : vector<8x1xf32> to vector<8x32xf32>
    %97 = arith.addf %95, %96 : vector<8x32xf32>
    %c0_28 = arith.constant 0 : index
    %c0_29 = arith.constant 0 : index
    %98 = vector.load %arg3[%c0_28, %c0_29] : memref<8x32xf32, #tpu.memory_space<vmem>>, vector<8x32xf32>
    tpu.vector_store %arg3[%c0_28, %c0_29], %97 {strides = array<i32>} : memref<8x32xf32, #tpu.memory_space<vmem>>, vector<8x32xf32>,
    return
  }
}

</mosaic_0001>

<llo_original>
// kernel: tpu_custom_call.1
$region0: #{tpu_custom_call.1}
  #allocation0 [shape = 'u32[]', space=smem, size = 0x4, offset = 0x4, fixed_abs, tag = 'smem constant byte address 0x4 - core index']
  #allocation1 [shape = 'u32[144,128]{1,0:T(1,128)}', space=vmem, size = 0x12000, scoped, tag = 'internal scratch']
  %s0 = inlined_call_operand.vmem [shape: f32[8,32], index: 0, kind: input, shape index: {}]
  %s1 = inlined_call_operand.hbm [shape: f32[8,32], index: 1, kind: input, shape index: {}]
  %s2 = inlined_call_operand.vmem [shape: f32[8,2], index: 2, kind: input, shape index: {}]
  %s3 = inlined_call_operand.hbm [shape: f32[8,32], index: 3, kind: output, shape index: {0}]
  %s4 = inlined_call_operand.hbm [shape: f32[2,8], index: 4, kind: output, shape index: {1}]
  %5 = xla_tuple %s3, %s4
  %s6 = sld [smem:[#allocation0]]
  $region34: #{tpu_custom_call.1} parent=0
    _
  %s8 = ssub.s32 1, %s6
  %s9 = scalar_select 0, %s8, %s6
  $region1: #{tpu_custom_call.1} parent=0
    #allocation2 [shape = 'u8[4096]{0}', space=vmem, size = 0x1000, scoped, tag = 'input window, operand 1, single buffered']
    #allocation3 [shape = 's32[1]{0}', space=sflag, size = 0x4, scoped, tag = 'scoped memory for tpu_custom_call.1']
    #allocation4 [shape = 's32[1]{0}', space=sflag, size = 0x4, scoped, tag = 'scoped memory for tpu_custom_call.1']
    #allocation5 [shape = 'u8[4096]{0}', space=vmem, size = 0x1000, scoped, tag = 'output window, operand 0, single buffered']
    #allocation6 [shape = 'u8[1024]{0}', space=vmem, size = 0x400, scoped, tag = 'output window, operand 1, single buffered']
    #allocation7 [shape = 's32[1]{0}', space=sflag, size = 0x4, scoped, tag = 'scoped memory for tpu_custom_call.1']
    %10 = vsyncpa [#allocation3], 0
    %11 = vsyncpa [#allocation4], 0
    %12 = vsyncpa [#allocation7], 0
    // Predicated region
    $region2: #{tpu_custom_call.1} parent=1 // pred_check
      _
    $region3: #{tpu_custom_call.1} parent=1 // pred_check_branch
      %14 = sbr.rel (0) target = $region5
    $region4: #{tpu_custom_call.1} parent=1 // pred_region
      _
    $region5: #{tpu_custom_call.1} parent=1 // pred_fallthru
      _
    // Predicated region
    $region6: #{tpu_custom_call.1} parent=1 // pred_check
      _
    $region7: #{tpu_custom_call.1} parent=1 // pred_check_branch
      %16 = sbr.rel (0) target = $region9
    $region8: #{tpu_custom_call.1} parent=1 // pred_region
      %s18 = ssub.s32 128, 128
      %19 = vsyncadd [#allocation3], %s18
      %s21 = sshll.u32 [#allocation2], 4
      %s22 = int_to_ptr.vmem [resolvable:$true] %s21
      %24 = dma.hbm_to_vmem [thread:$0]  %s1, 128, %s22, [#allocation3]
    $region9: #{tpu_custom_call.1} parent=1 // pred_fallthru
      _
    // Predicated region
    $region10: #{tpu_custom_call.1} parent=1 // pred_check
      _
    $region11: #{tpu_custom_call.1} parent=1 // pred_check_branch
      %26 = sbr.rel (0) target = $region13
    $region12: #{tpu_custom_call.1} parent=1 // pred_region
      _
    $region13: #{tpu_custom_call.1} parent=1 // pred_fallthru
      _
    // Predicated region
    $region14: #{tpu_custom_call.1} parent=1 // pred_check
      _
    $region15: #{tpu_custom_call.1} parent=1 // pred_check_branch
      %28 = sbr.rel (0) target = $region17
    $region16: #{tpu_custom_call.1} parent=1 // pred_region
      %29 = dma.done [#allocation3], 128
    $region17: #{tpu_custom_call.1} parent=1 // pred_fallthru
      _
    %v30 = vld [vmem:[%s0] sm:$0xff]
    %v31 = vld [vmem:[#allocation2] sm:$0xff]
    %vm32 = vcmask 261120
    %v33 = vsel %vm32, %v30, 0.0
    %34 = vadd.xlane.f32.xlu0 %v33
    %v35 = vpop.xlane.xlu0 %34
    %v36 = vrcp.pop 32.0
    %v37 = vmul.f32 %v35, %v36
    %v38 = vsel %vm32, %v30, -inf
    %39 = vmax.xlane.f32.xlu0 %v38
    %v40 = vpop.xlane.xlu0 %39
    %v41 = vadd.f32 %v37, %v40
    %v42 = vadd.f32 %v41, 1e-06
    %v43 = vmul.f32 %v30, %v42
    %vm44 = vcmask 257024
    %v45 = vsel %vm44, %v43, 0.0
    %v46 = vrot.slane %v45, 4
    %v47 = vadd.f32 %v45, %v46
    %v48 = vrot.slane %v47, 2
    %v49 = vadd.f32 %v47, %v48
    %v50 = vrot.slane %v49, 1
    %v51 = vadd.f32 %v49, %v50
    %v53 = vrot.slane %v43, 4
    %v55 = vsel %vm44, %v53, 0.0
    %v56 = vrot.slane %v55, 4
    %v57 = vadd.f32 %v55, %v56
    %v58 = vrot.slane %v57, 2
    %v59 = vadd.f32 %v57, %v58
    %v60 = vrot.slane %v59, 1
    %v61 = vadd.f32 %v59, %v60
    %vm62 = vcmask 1040384
    %v63 = vsel %vm62, %v51, %v61
    %v66 = vunpack.c.l.s4 1966171168
    %v67 = vunpack.c.0.s8 %v66
    %v68 = vlaneseq
    %v69 = vshrl.u32 %v68, 7
    %v70 = vsub.s32 %v67, %v69
    %v71 = vrot.slane %v63, %v70
    %v72 = vcombine.high %v71, %v71
    %v74 = vunpack.c.l.s4 1966171168
    %v75 = vunpack.c.0.s8 %v74
    %v76 = vlaneseq
    %v77 = vshrl.u32 %v76, 7
    %v78 = vsub.s32 %v75, %v77
    %v79 = vrot.slane %v71, %v78
    %v81 = vunpack.c.l.s4 1966171168
    %v82 = vunpack.c.0.s8 %v81
    %v83 = vlaneseq
    %v84 = vshrl.u32 %v83, 7
    %v85 = vsub.s32 %v82, %v84
    %v86 = vrot.slane %v72, %v85
    %v87 = vlaneseq
    %v88 = vshrl.u32 %v87, 7
    %v89 = vsub.s32 0, %v88
    %v90 = vrot.slane %v79, %v89
    %v91 = vlaneseq
    %v92 = vshrl.u32 %v91, 7
    %v93 = vsub.s32 0, %v92
    %v94 = vrot.slane %v86, %v93
    %v97 = vmul.f32 %v90, %v31
    %v98 = vmul.f32 %v94, %v31
    %v99 = vsel %vm32, %v97, 0.0
    %100 = vadd.xlane.f32.xlu0 %v99
    %v101 = vpop.xlane.xlu0 %100
    %v102 = vsel %vm32, %v98, 0.0
    %103 = vadd.xlane.f32.xlu0 %v102
    %v104 = vpop.xlane.xlu0 %103
    %v105 = vmax.f32 %v101, -1000000.0
    %v106 = vmax.f32 %v104, -1000000.0
    %v107 = vmin.f32 %v105, 1000000.0
    %v108 = vmin.f32 %v106, 1000000.0
    %v111 = vlaneseq
    %v112 = vand.u32 %v111, 127
    %v113 = vlaneseq
    %v114 = vshrl.u32 %v113, 7
    %v115 = vsub.s32 %v112, %v114
    %v116 = vrot.slane %v107, %v115
    %v117 = vlaneseq
    %v118 = vshrl.u32 %v117, 7
    %v119 = vsub.s32 %v112, %v118
    %v120 = vrot.slane %v108, %v119
    %vm121 = vcmask 1041409
    %v122 = vsel %vm121, %v120, %v116
    %vm124 = vcmask 58368
    %125 = vst.msk [vmem:[#allocation6] sm:$0x3] %vm124, %v122
    %v126 = vsel %vm124, %v122, -inf
    %127 = vmax.xlane.f32.xlu0 %v126
    %v128 = vpop.xlane.xlu0 %127
    %v130 = vlaneseq
    %v131 = vshrl.u32 %v130, 7
    %v132 = vsub.s32 0, %v131
    %v133 = vrot.slane %v128, %v132
    %v134 = vlaneseq
    %v135 = vshrl.u32 %v134, 7
    %v136 = vsub.s32 1, %v135
    %v137 = vrot.slane %v128, %v136
    %vm140 = vcmp.eq.f32.partialorder %v107, %v133
    %vm141 = vcmp.eq.f32.partialorder %v108, %v137
    %143 = vbcast.lane.b32.xlu0 %v112, 256
    %v144 = vpop.permute.xlu0 %143
    %v145 = vsel %vm140, %v144, 8
    %v146 = vsel %vm141, %v144, 8
    %147 = vset.pattern.permute.xlu0 0
    %148 = vperm.xlu0 %147, %v145
    %v149 = vpop.permute.xlu0 %148
    %150 = vset.pattern.permute.xlu0 0
    %151 = vperm.xlu0 %150, %v146
    %v152 = vpop.permute.xlu0 %151
    %v153 = vlaneseq
    %v154 = vshrl.u32 %v153, 7
    %v155 = vsub.s32 %v112, %v154
    %v156 = vrot.slane %v149, %v155
    %v157 = vlaneseq
    %v158 = vshrl.u32 %v157, 7
    %v159 = vsub.s32 %v112, %v158
    %v160 = vrot.slane %v152, %v159
    %v161 = vsel %vm121, %v160, %v156
    %v162 = vsel %vm124, %v161, 2147483647
    %v163 = vand.u32 %v162, 65535
    %v164 = vshra.s32 %v162, 16
    %v165 = vcvt.s32.f32 %v163
    %v166 = vcvt.s32.f32 %v164
    %167 = vmin.xlane.f32.xlu0 %v166
    %v168 = vpop.xlane.xlu0 %167
    %vm169 = vcmp.eq.f32.partialorder %v166, %v168
    %v170 = vsel %vm169, %v165, inf
    %171 = vmin.xlane.f32.xlu0 %v170
    %v172 = vpop.xlane.xlu0 %171
    %v173 = vcvt.f32.s32 %v172
    %v174 = vcvt.f32.s32 %v168
    %v175 = vshll.u32 %v174, 16
    %v176 = vadd.s32 %v175, %v173
    %vm177 = vcmp.lt.s32.totalorder %v176, 7
    %v178 = vsel %vm177, %v176, 7
    %vm179 = vcmp.eq.s32.totalorder %v112, %v178
    %v180 = vsel %vm179, 1, 0
    %v181 = vcvt.s32.f32 %v180
    %v182 = vlaneseq
    %v183 = vshrl.u32 %v182, 7
    %v184 = vsub.s32 0, %v183
    %v185 = vrot.slane %v181, %v184
    %187 = vbcast.lane.b32.xlu0 %v185, 256
    %v188 = vpop.permute.xlu0 %187
    %v189 = vlaneseq
    %v190 = vshrl.u32 %v189, 7
    %v191 = vsub.s32 1, %v190
    %v192 = vrot.slane %v181, %v191
    %194 = vbcast.lane.b32.xlu0 %v192, 256
    %v195 = vpop.permute.xlu0 %194
    %v196 = vmul.f32 %v188, %v31
    %v197 = vmul.f32 %v195, %v31
    %v198 = vsel %vm32, %v196, 0.0
    %v199 = vrot.slane %v198, 4
    %v200 = vadd.f32 %v198, %v199
    %v201 = vrot.slane %v200, 2
    %v202 = vadd.f32 %v200, %v201
    %v203 = vrot.slane %v202, 1
    %v204 = vadd.f32 %v202, %v203
    %v205 = vsel %vm32, %v197, 0.0
    %v206 = vrot.slane %v205, 4
    %v207 = vadd.f32 %v205, %v206
    %v208 = vrot.slane %v207, 2
    %v209 = vadd.f32 %v207, %v208
    %v210 = vrot.slane %v209, 1
    %v211 = vadd.f32 %v209, %v210
    %vm212 = vcmask 1043456
    %v213 = vsel %vm212, %v204, %v211
    %v214 = vmul.f32 %v30, 0.4
    %v215 = vmul.f32 %v214, %v213
    %v216 = vmul.f32 %v30, 0.6
    %v217 = vadd.f32 %v215, %v216
    %vm218 = vweird.f32 %v217
    %vm219 = vmxor %vm218, 1
    %v220 = vsel %vm219, %v217, 0.0
    %v221 = vsel %vm32, %v220, 0.0
    %222 = vadd.xlane.f32.xlu0 %v221
    %v223 = vpop.xlane.xlu0 %222
    %v225 = vrot.slane %v223, 4
    %v227 = vadd.f32 %v223, %v225
    %v229 = vrot.slane %v227, 4
    %v231 = vsel %vm212, %v227, %v229
    %v232 = vmul.f32 %v231, 0.015625
    %234 = vset.pattern.permute.xlu0 0
    %235 = vperm.xlu0 %234, %v232
    %v236 = vpop.permute.xlu0 %235
    %v238 = vsub.f32 %v220, %v236
    %v239 = vmul.f32 %v238, %v238
    %v240 = vsel %vm32, %v239, 0.0
    %241 = vadd.xlane.f32.xlu0 %v240
    %v242 = vpop.xlane.xlu0 %241
    %v244 = vrot.slane %v242, 4
    %v246 = vadd.f32 %v242, %v244
    %v248 = vrot.slane %v246, 4
    %v250 = vsel %vm212, %v246, %v248
    %v251 = vmul.f32 %v250, 0.015625
    %v252 = vld [vmem:[%s2] sm:$0xff]
    %v253 = vadd.f32 %v251, 1e-05
    %v254 = vrsqrt.pop %v253
    %v255 = vmul.f32 %v254, %v252
    %257 = vset.pattern.permute.xlu0 0
    %258 = vperm.xlu0 %257, %v255
    %v259 = vpop.permute.xlu0 %258
    %v261 = vmul.f32 %v238, %v259
    %263 = vset.pattern.permute.xlu0 1
    %264 = vperm.xlu0 %263, %v252
    %v265 = vpop.permute.xlu0 %264
    %v267 = vadd.f32 %v261, %v265
    %268 = vst.msk [vmem:[#allocation5] sm:$0xff] %vm32, %v267
    // Predicated region
    $region18: #{tpu_custom_call.1} parent=1 // pred_check
      _
    $region19: #{tpu_custom_call.1} parent=1 // pred_check_branch
      %270 = sbr.rel (0) target = $region21
    $region20: #{tpu_custom_call.1} parent=1 // pred_region
      %s272 = ssub.s32 128, 128
      %273 = vsyncadd [#allocation4], %s272
      %s275 = sshll.u32 [#allocation5], 4
      %s276 = int_to_ptr.vmem [resolvable:$true] %s275
      %278 = dma.vmem_to_hbm [thread:$0]  %s276, 128, %s3, [#allocation4]
    $region21: #{tpu_custom_call.1} parent=1 // pred_fallthru
      _
    // Predicated region
    $region22: #{tpu_custom_call.1} parent=1 // pred_check
      _
    $region23: #{tpu_custom_call.1} parent=1 // pred_check_branch
      %280 = sbr.rel (0) target = $region25
    $region24: #{tpu_custom_call.1} parent=1 // pred_region
      %s282 = ssub.s32 32, 32
      %283 = vsyncadd [#allocation7], %s282
      %s285 = sshll.u32 [#allocation6], 4
      %s286 = int_to_ptr.vmem [resolvable:$true] %s285
      %288 = dma.vmem_to_hbm [thread:$0]  %s286, 32, %s4, [#allocation7]
    $region25: #{tpu_custom_call.1} parent=1 // pred_fallthru
      _
    // Predicated region
    $region26: #{tpu_custom_call.1} parent=1 // pred_check
      _
    $region27: #{tpu_custom_call.1} parent=1 // pred_check_branch
      %290 = sbr.rel (0) target = $region29
    $region28: #{tpu_custom_call.1} parent=1 // pred_region
      %291 = dma.done [#allocation4], 128
    $region29: #{tpu_custom_call.1} parent=1 // pred_fallthru
      _
    // Predicated region
    $region30: #{tpu_custom_call.1} parent=1 // pred_check
      _
    $region31: #{tpu_custom_call.1} parent=1 // pred_check_branch
      %293 = sbr.rel (0) target = $region33
    $region32: #{tpu_custom_call.1} parent=1 // pred_region
      %294 = dma.done [#allocation7], 32
    $region33: #{tpu_custom_call.1} parent=1 // pred_fallthru
      _
    %295 = vsyncpa [#allocation3], 1
    %296 = vsyncpa [#allocation4], 1
    %297 = vsyncpa [#allocation7], 1

</llo_original>
